<compile_context>
chip_gen: v7x
topology: tpu7x:2x2x1
jax: 0.10.0
libtpu: 0.0.40
codegen_flags: <defaults>
</compile_context>

<pallas_src>
import functools

import numpy as np
import jax
import jax.numpy as jnp
from jax.experimental import pallas as pl
from jax.experimental.pallas import tpu as pltpu

_EPS = 1e-7


def _round_up(x, m):
    return (x + m - 1) // m * m


def _vmem_capacity_bytes():
    try:
        return int(pltpu.get_tpu_info().vmem_capacity_bytes)
    except Exception:
        return 64 * 1024 * 1024  # conservative (v7x-sized) fallback


def _plan(n_tgt, n_src, din_p, do_p, budget):
    """Pick padded extents and tile sizes against an explicit VMEM byte budget."""
    if n_tgt <= 256:
        nt_p = _round_up(n_tgt, 8)        # avoid the 128-row padding tax on tiny N_tgt
        tm = nt_p
    else:
        nt_p = _round_up(n_tgt, 128)
        tm = next(t for t in (512, 256, 128) if nt_p % t == 0)   # 256-multiples for v6e/v7x MXU
    ns_p = _round_up(n_src, 128)

    def vmem_bytes(ts, tn):
        # double-buffered input/output tiles + single-buffered fc cache
        tiles = 2 * (tm * ts * 2          # A tile (bf16)
                     + ts * din_p * 2     # S tile (bf16, full-K)
                     + din_p * tn * 2     # W^T tile (bf16, full-K)
                     + tn * 4             # bias tile (f32)
                     + tm * 4             # 1/(rowsum+eps) tile (f32)
                     + tm * tn * 4)       # resident output block (f32)
        cache = ns_p * tn * 2             # VMEM-resident fc_out cache (bf16)
        return tiles + cache

    ts_cands = [t for t in (512, 256, 128) if ns_p % t == 0] or [ns_p]
    tn_cands = [do_p] + [t for t in (1024, 512, 256, 128) if t < do_p and do_p % t == 0]
    ts = tn = None
    for tn_c in tn_cands:        # prefer nj == 1: every extra dim_out tile re-streams A
        for ts_c in ts_cands:
            if vmem_bytes(ts_c, tn_c) <= budget:
                ts, tn = ts_c, tn_c
                break
        if tn is not None:
            break
    if tn is None:
        # TODO(synk): two-pass design with fc_out staged in HBM for very large
        # n_src * dim_out that cannot keep the fc cache resident in VMEM.
        ts, tn = ts_cands[-1], tn_cands[-1]
    return nt_p, ns_p, tm, ts, tn


# -----------------------------------------------------------------------------
# Fused kernel.
# grid = (j: dim_out tiles [parallel], i: target-row tiles, k: source-row tiles)
# -----------------------------------------------------------------------------
def _collection_kernel(a_ref, s_ref, wt_ref, b_ref, inv_ref, o_ref, fc_ref):
    i = pl.program_id(1)
    k = pl.program_id(2)

    # Stage 1: fc = relu(S @ W^T + b) for this (j, k) tile.  Computed only on the
    # first target-row tile and cached in VMEM (bf16) for all later target tiles.
    # NOTE: requires i == 0 to run before other i for each j -> do NOT mark the
    # i axis "parallel" with this design.
    @pl.when(i == 0)
    def _():
        fc = jnp.dot(s_ref[...], wt_ref[...], preferred_element_type=jnp.float32)
        fc = jnp.maximum(fc + b_ref[...], 0.0)
        fc_ref[k] = fc.astype(fc_ref.dtype)

    # Stage 2: accumulate collect directly into the resident output block (its
    # index map ignores k, so it stays in VMEM across the whole reduction).
    @pl.when(k == 0)
    def _():
        o_ref[...] = jnp.zeros_like(o_ref)

    o_ref[...] += jnp.dot(a_ref[...], fc_ref[k], preferred_element_type=jnp.float32)

    # Epilogue: multiply by the precomputed f32 1/(rowsum + eps).
    @pl.when(k == pl.num_programs(2) - 1)
    def _():
        o_ref[...] *= inv_ref[...]


@functools.partial(jax.jit, static_argnames=("dim_out",))
def _collection_forward(attention_base, source, wt_pad, b_pad, *, dim_out):
    n_tgt, n_src = attention_base.shape
    dim_in = source.shape[1]
    din_p, do_p = wt_pad.shape

    budget = int(0.8 * _vmem_capacity_bytes())
    nt_p, ns_p, tm, ts, tn = _plan(n_tgt, n_src, din_p, do_p, budget)
    nj, ni, nk = do_p // tn, nt_p // tm, ns_p // ts

    # f32 denominator (exact vs. the reference) computed once per call; XLA fuses
    # this reduction with the pad/cast pass below so A is read only once here.
    a32 = attention_base.astype(jnp.float32)
    inv = 1.0 / (jnp.sum(a32, axis=1, keepdims=True) + _EPS)
    if nt_p != n_tgt:
        inv = jnp.pad(inv, ((0, nt_p - n_tgt), (0, 0)))

    # bf16 A in HBM (halves the dominant streamed operand); pad fused with the cast,
    # and skipped entirely when shapes are already aligned.
    if (nt_p, ns_p) == (n_tgt, n_src):
        a_pad = attention_base.astype(jnp.bfloat16)
    else:
        a_pad = jnp.pad(attention_base,
                        ((0, nt_p - n_tgt), (0, ns_p - n_src))).astype(jnp.bfloat16)
    if (ns_p, din_p) == (n_src, dim_in):
        s_pad = source.astype(jnp.bfloat16)
    else:
        s_pad = jnp.pad(source,
                        ((0, ns_p - n_src), (0, din_p - dim_in))).astype(jnp.bfloat16)

    # S is only consumed at i == 0; clamping its block index when i > 0 makes the
    # pipeline skip its DMA on every later target-row tile.
    s_index_map = lambda j, i, k: (jnp.where(i == 0, k, nk - 1), 0)

    out = pl.pallas_call(
        _collection_kernel,
        out_shape=jax.ShapeDtypeStruct((nt_p, do_p), jnp.float32),
        grid_spec=pltpu.PrefetchScalarGridSpec(
            num_scalar_prefetch=0,
            grid=(nj, ni, nk),
            in_specs=[
                pl.BlockSpec((tm, ts), lambda j, i, k: (i, k)),      # A (bf16)
                pl.BlockSpec((ts, din_p), s_index_map),              # S (bf16, full-K)
                pl.BlockSpec((din_p, tn), lambda j, i, k: (0, j)),   # W^T (bf16, full-K)
                pl.BlockSpec((1, tn), lambda j, i, k: (0, j)),       # bias (f32)
                pl.BlockSpec((tm, 1), lambda j, i, k: (i, 0)),       # 1/(rowsum+eps) (f32)
            ],
            out_specs=pl.BlockSpec((tm, tn), lambda j, i, k: (i, j)),
            scratch_shapes=[
                pltpu.VMEM((nk, ts, tn), jnp.bfloat16),   # VMEM-resident fc_out cache
            ],
        ),
        compiler_params=pltpu.CompilerParams(
            dimension_semantics=("parallel", "arbitrary", "arbitrary"),
            vmem_limit_bytes=budget),
    )(a_pad, s_pad, wt_pad, b_pad, inv)

    return out[:n_tgt, :dim_out]


class CollectionUnitPallas:
    """Pallas port of _Collection_Unit: fc = nn.Linear(dim_in, dim_out), normal_init(0, 0.01)."""

    def __init__(self, key, dim_in, dim_out):
        # normal_init(self.fc, 0, 0.01): weight ~ N(0, 0.01), bias = 0
        w = 0.01 * jax.random.normal(key, (dim_out, dim_in), jnp.float32)
        b = jnp.zeros((dim_out,), jnp.float32)
        self.load_params(w, b)

    def load_params(self, w, b):
        dim_out, dim_in = w.shape
        self.dim_in, self.dim_out = dim_in, dim_out
        din_p = _round_up(dim_in, 128)
        do_p = _round_up(dim_out, 128)
        # Pad + transpose + cast to bf16 once at init (lane-dense along dim_out).
        wt = jnp.zeros((din_p, do_p), jnp.float32).at[:dim_in, :dim_out].set(w.T)
        self.wt_pad = wt.astype(jnp.bfloat16)
        self.b_pad = jnp.zeros((1, do_p), jnp.float32).at[0, :dim_out].set(b)
        self.w, self.b = w, b  # f32 copies kept for reference checks

    def __call__(self, target, source, attention_base):
        # `target` is unused by the reference forward; kept for signature parity.
        del target
        return _collection_forward(attention_base, source, self.wt_pad, self.b_pad,
                                   dim_out=self.dim_out)


def _reference(source, attention_base, w, b):
    fc_out = jax.nn.relu(source @ w.T + b)
    collect = attention_base @ fc_out
    return collect / (jnp.sum(attention_base, axis=1, keepdims=True) + _EPS)


if __name__ == "__main__":
    key = jax.random.PRNGKey(0)
    k_w, k_s, k_a, k_t, k_w2, k_s2, k_a2 = jax.random.split(key, 7)

    # ---- case 1: small, unaligned shapes (exercises padding + final slicing) ----
    dim_in, dim_out = 20, 48
    n_src, n_tgt = 10, 6
    unit = CollectionUnitPallas(k_w, dim_in, dim_out)
    source = jax.random.normal(k_s, (n_src, dim_in), jnp.float32)
    attention = jax.random.uniform(k_a, (n_tgt, n_src), jnp.float32)
    target = jax.random.normal(k_t, (n_tgt, dim_out), jnp.float32)  # unused by forward

    out = unit(target, source, attention)
    out = jax.block_until_ready(out)
    assert out.shape == (n_tgt, dim_out)
    ref = _reference(source, attention, unit.w, unit.b)
    np.testing.assert_allclose(np.asarray(out), np.asarray(ref), rtol=3e-2, atol=3e-3)

    # ---- case 2: multi-tile grid (exercises fc-cache reuse across target tiles,
    #      the k-reduction into the resident output block, and the S DMA clamp) ----
    dim_in2, dim_out2 = 96, 256
    n_src2, n_tgt2 = 384, 300
    unit2 = CollectionUnitPallas(k_w2, dim_in2, dim_out2)
    source2 = jax.random.normal(k_s2, (n_src2, dim_in2), jnp.float32)
    attention2 = jax.random.uniform(k_a2, (n_tgt2, n_src2), jnp.float32)

    out2 = unit2(None, source2, attention2)
    out2 = jax.block_until_ready(out2)
    assert out2.shape == (n_tgt2, dim_out2)
    ref2 = _reference(source2, attention2, unit2.w, unit2.b)
    np.testing.assert_allclose(np.asarray(out2), np.asarray(ref2), rtol=3e-2, atol=3e-3)

    print("KERNEL_OK")
</pallas_src>

<mosaic_0001>
module attributes {stable_mosaic.version = 11 : i64} {
  func.func @_collection_kernel(%arg0: i32, %arg1: i32, %arg2: i32, %arg3: memref<8x128xbf16, #tpu.memory_space<vmem>>, %arg4: memref<128x128xbf16, #tpu.memory_space<vmem>>, %arg5: memref<128x128xbf16, #tpu.memory_space<vmem>>, %arg6: memref<1x128xf32, #tpu.memory_space<vmem>>, %arg7: memref<8x1xf32, #tpu.memory_space<vmem>>, %arg8: memref<8x128xf32, #tpu.memory_space<vmem>>, %arg9: memref<1x128x128xbf16, #tpu.memory_space<vmem>>) attributes {dimension_semantics = [#tpu.dimension_semantics<parallel>, #tpu.dimension_semantics<arbitrary>, #tpu.dimension_semantics<arbitrary>], iteration_bounds = array<i64: 1, 1, 1>, scalar_prefetch = 0 : i64, scratch_operands = 1 : i64, tpu.core_type = #tpu.core_type<tc>, window_params = [{transform_indices = @transform_0, window_bounds = array<i64: 8, 128>}, {transform_indices = @transform_1, window_bounds = array<i64: 128, 128>}, {transform_indices = @transform_2, window_bounds = array<i64: 128, 128>}, {transform_indices = @transform_3, window_bounds = array<i64: 1, 128>}, {transform_indices = @transform_4, window_bounds = array<i64: 8, 1>}, {transform_indices = @transform_5, window_bounds = array<i64: 8, 128>}]} {
    %c0_i32 = arith.constant 0 : i32
    %0 = arith.cmpi eq, %arg1, %c0_i32 : i32
    %1 = arith.extui %0 : i1 to i32
    %c0_i32_0 = arith.constant 0 : i32
    %2 = arith.cmpi ne, %1, %c0_i32_0 : i32
    scf.if %2 {
      %c0_12 = arith.constant 0 : index
      %c0_13 = arith.constant 0 : index
      %17 = vector.load %arg4[%c0_12, %c0_13] : memref<128x128xbf16, #tpu.memory_space<vmem>>, vector<128x128xbf16>
      %c0_14 = arith.constant 0 : index
      %c0_15 = arith.constant 0 : index
      %18 = vector.load %arg5[%c0_14, %c0_15] : memref<128x128xbf16, #tpu.memory_space<vmem>>, vector<128x128xbf16>
      %cst_16 = arith.constant dense<0.000000e+00> : vector<128x128xf32>
      %19 = tpu.matmul %17, %18, %cst_16 {dimension_numbers = #tpu.dot_dimension_numbers<[1], [0], [0], [1], [0, 0, 1, 1], [], []>} : vector<128x128xbf16>, vector<128x128xbf16>, vector<128x128xf32> -> vector<128x128xf32>
      %c0_17 = arith.constant 0 : index
      %c0_18 = arith.constant 0 : index
      %20 = vector.load %arg6[%c0_17, %c0_18] : memref<1x128xf32, #tpu.memory_space<vmem>>, vector<1x128xf32>
      %21 = vector.broadcast %20 : vector<1x128xf32> to vector<128x128xf32>
      %22 = arith.addf %19, %21 : vector<128x128xf32>
      %cst_19 = arith.constant 0.000000e+00 : f32
      %23 = vector.broadcast %cst_19 : f32 to vector<128x128xf32>
      %24 = arith.maximumf %22, %23 : vector<128x128xf32>
      %25 = arith.truncf %24 : vector<128x128xf32> to vector<128x128xbf16>
      %26 = arith.index_cast %arg2 : i32 to index
      %c0_20 = arith.constant 0 : index
      %c0_21 = arith.constant 0 : index
      %27 = vector.load %arg9[%26, %c0_20, %c0_21] : memref<1x128x128xbf16, #tpu.memory_space<vmem>>, vector<1x128x128xbf16>
      %28 = vector.shape_cast %27 : vector<1x128x128xbf16> to vector<128x128xbf16>
      %29 = vector.shape_cast %25 : vector<128x128xbf16> to vector<1x128x128xbf16>
      tpu.vector_store %arg9[%26, %c0_20, %c0_21], %29 {strides = array<i32>} : memref<1x128x128xbf16, #tpu.memory_space<vmem>>, vector<1x128x128xbf16>,
    } else {
    }
    %c0_i32_1 = arith.constant 0 : i32
    %3 = arith.cmpi eq, %arg2, %c0_i32_1 : i32
    %4 = arith.extui %3 : i1 to i32
    %c0_i32_2 = arith.constant 0 : i32
    %5 = arith.cmpi ne, %4, %c0_i32_2 : i32
    scf.if %5 {
      %cst_12 = arith.constant 0.000000e+00 : f32
      %17 = vector.broadcast %cst_12 : f32 to vector<8x128xf32>
      %c0_13 = arith.constant 0 : index
      %c0_14 = arith.constant 0 : index
      %18 = vector.load %arg8[%c0_13, %c0_14] : memref<8x128xf32, #tpu.memory_space<vmem>>, vector<8x128xf32>
      tpu.vector_store %arg8[%c0_13, %c0_14], %17 {strides = array<i32>} : memref<8x128xf32, #tpu.memory_space<vmem>>, vector<8x128xf32>,
    } else {
    }
    %c0 = arith.constant 0 : index
    %c0_3 = arith.constant 0 : index
    %6 = vector.load %arg8[%c0, %c0_3] : memref<8x128xf32, #tpu.memory_space<vmem>>, vector<8x128xf32>
    %c0_4 = arith.constant 0 : index
    %c0_5 = arith.constant 0 : index
    %7 = vector.load %arg3[%c0_4, %c0_5] : memref<8x128xbf16, #tpu.memory_space<vmem>>, vector<8x128xbf16>
    %8 = arith.index_cast %arg2 : i32 to index
    %c0_6 = arith.constant 0 : index
    %c0_7 = arith.constant 0 : index
    %9 = vector.load %arg9[%8, %c0_6, %c0_7] : memref<1x128x128xbf16, #tpu.memory_space<vmem>>, vector<1x128x128xbf16>
    %10 = vector.shape_cast %9 : vector<1x128x128xbf16> to vector<128x128xbf16>
    %cst = arith.constant dense<0.000000e+00> : vector<8x128xf32>
    %11 = tpu.matmul %7, %10, %cst {dimension_numbers = #tpu.dot_dimension_numbers<[1], [0], [0], [1], [0, 0, 1, 1], [], []>} : vector<8x128xbf16>, vector<128x128xbf16>, vector<8x128xf32> -> vector<8x128xf32>
    %12 = arith.addf %6, %11 : vector<8x128xf32>
    %c0_8 = arith.constant 0 : index
    %c0_9 = arith.constant 0 : index
    %13 = vector.load %arg8[%c0_8, %c0_9] : memref<8x128xf32, #tpu.memory_space<vmem>>, vector<8x128xf32>
    tpu.vector_store %arg8[%c0_8, %c0_9], %12 {strides = array<i32>} : memref<8x128xf32, #tpu.memory_space<vmem>>, vector<8x128xf32>,
    %c0_i32_10 = arith.constant 0 : i32
    %14 = arith.cmpi eq, %arg2, %c0_i32_10 : i32
    %15 = arith.extui %14 : i1 to i32
    %c0_i32_11 = arith.constant 0 : i32
    %16 = arith.cmpi ne, %15, %c0_i32_11 : i32
    scf.if %16 {
      %c0_12 = arith.constant 0 : index
      %c0_13 = arith.constant 0 : index
      %17 = vector.load %arg8[%c0_12, %c0_13] : memref<8x128xf32, #tpu.memory_space<vmem>>, vector<8x128xf32>
      %c0_14 = arith.constant 0 : index
      %c0_15 = arith.constant 0 : index
      %18 = vector.load %arg7[%c0_14, %c0_15] : memref<8x1xf32, #tpu.memory_space<vmem>>, vector<8x1xf32>
      %19 = vector.broadcast %18 : vector<8x1xf32> to vector<8x128xf32>
      %20 = arith.mulf %17, %19 : vector<8x128xf32>
      %c0_16 = arith.constant 0 : index
      %c0_17 = arith.constant 0 : index
      %21 = vector.load %arg8[%c0_16, %c0_17] : memref<8x128xf32, #tpu.memory_space<vmem>>, vector<8x128xf32>
      tpu.vector_store %arg8[%c0_16, %c0_17], %20 {strides = array<i32>} : memref<8x128xf32, #tpu.memory_space<vmem>>, vector<8x128xf32>,
    } else {
    }
    return
  }
  func.func @transform_0(%arg0: i32, %arg1: i32, %arg2: i32) -> (i32, i32) {
    %c0_i32 = arith.constant 0 : i32
    return %arg1, %arg2 : i32, i32
  }
  func.func @transform_1(%arg0: i32, %arg1: i32, %arg2: i32) -> (i32, i32) {
    %c0_i32 = arith.constant 0 : i32
    %0 = arith.cmpi eq, %arg1, %c0_i32 : i32
    %c0_i32_0 = arith.constant 0 : i32
    %1 = arith.select %0, %arg2, %c0_i32_0 : i32
    %c0_i32_1 = arith.constant 0 : i32
    %c0_i32_2 = arith.constant 0 : i32
    return %1, %c0_i32_1 : i32, i32
  }
  func.func @transform_2(%arg0: i32, %arg1: i32, %arg2: i32) -> (i32, i32) {
    %c0_i32 = arith.constant 0 : i32
    %c0_i32_0 = arith.constant 0 : i32
    return %c0_i32, %arg0 : i32, i32
  }
  func.func @transform_3(%arg0: i32, %arg1: i32, %arg2: i32) -> (i32, i32) {
    %c0_i32 = arith.constant 0 : i32
    %c0_i32_0 = arith.constant 0 : i32
    return %c0_i32, %arg0 : i32, i32
  }
  func.func @transform_4(%arg0: i32, %arg1: i32, %arg2: i32) -> (i32, i32) {
    %c0_i32 = arith.constant 0 : i32
    %c0_i32_0 = arith.constant 0 : i32
    return %arg1, %c0_i32 : i32, i32
  }
  func.func @transform_5(%arg0: i32, %arg1: i32, %arg2: i32) -> (i32, i32) {
    %c0_i32 = arith.constant 0 : i32
    return %arg1, %arg0 : i32, i32
  }
}

</mosaic_0001>

<llo_original>
// kernel: _collection_forward.1
$region0: #{_collection_forward.1}
  #allocation0 [shape = 'u32[]', space=smem, size = 0x4, offset = 0x4, fixed_abs, tag = 'smem constant byte address 0x4 - core index']
  #allocation1 [shape = 'u32[144,128]{1,0:T(1,128)}', space=vmem, size = 0x12000, scoped, tag = 'internal scratch']
  #allocation2 [shape = 'bf16[1,128,128]{2,1,0:T(16,128)(2,1)}', space=vmem, size = 0x8000, scoped, tag = 'scratch operand']
  %s0 = inlined_call_operand.vmem [shape: bf16[8,128], index: 0, kind: input, shape index: {}]
  %s1 = inlined_call_operand.vmem [shape: bf16[128,128], index: 1, kind: input, shape index: {}]
  %s2 = inlined_call_operand.vmem [shape: bf16[128,128], index: 2, kind: input, shape index: {}]
  %s3 = inlined_call_operand.vmem [shape: f32[1,128], index: 3, kind: input, shape index: {}]
  %s4 = inlined_call_operand.vmem [shape: f32[8,1], index: 4, kind: input, shape index: {}]
  %s5 = inlined_call_operand.hbm [shape: f32[8,128], index: 5, kind: output, shape index: {}]
  %s6 = sld [smem:[#allocation0]]
  $region42: #{_collection_forward.1} parent=0
    _
  %s8 = ssub.s32 1, %s6
  %s9 = scalar_select 0, %s8, %s6
  $region1: #{_collection_forward.1} parent=0
    #allocation3 [shape = 'u8[4096]{0}', space=vmem, size = 0x1000, scoped, tag = 'output window, operand 0, single buffered']
    #allocation4 [shape = 's32[1]{0}', space=sflag, size = 0x4, scoped, tag = 'scoped memory for _collection_forward.1']
    %10 = vsyncpa [#allocation4], 0
    // Predicated region
    $region2: #{_collection_forward.1} parent=1 // pred_check
      _
    $region3: #{_collection_forward.1} parent=1 // pred_check_branch
      %12 = sbr.rel (0) target = $region5
    $region4: #{_collection_forward.1} parent=1 // pred_region
      _
    $region5: #{_collection_forward.1} parent=1 // pred_fallthru
      _
    // Predicated region
    $region6: #{_collection_forward.1} parent=1 // pred_check
      _
    $region7: #{_collection_forward.1} parent=1 // pred_check_branch
      %14 = sbr.rel (0) target = $region9
    $region8: #{_collection_forward.1} parent=1 // pred_region
      %p15 = scmp.eq.s32.totalorder 0, 0
      %s16 = scalar_select %p15, 0, 0
      %s17 = smul.u32 16, %s16
      %p18 = scmp.lt.s32.totalorder %s17, 15
      %s19 = scalar_select %p18, %s17, 15
      %s20 = smul.addr %s19, 4
      %s21 = scalar_lea.vmem %s1, %s20
      %p22 = scmp.eq.s32.totalorder 0, 0
      %s23 = scalar_select %p22, 0, 0
      %s24 = smul.u32 16, %s23
    $region9: #{_collection_forward.1} parent=1 // pred_fallthru
      _
    // Predicated region
    $region10: #{_collection_forward.1} parent=1 // pred_check
      _
    $region11: #{_collection_forward.1} parent=1 // pred_check_branch
      %26 = sbr.rel (0) target = $region13
    $region12: #{_collection_forward.1} parent=1 // pred_region
      _
    $region13: #{_collection_forward.1} parent=1 // pred_fallthru
      _
    // Predicated region
    $region14: #{_collection_forward.1} parent=1 // pred_check
      _
    $region15: #{_collection_forward.1} parent=1 // pred_check_branch
      %28 = sbr.rel (0) target = $region17
    $region16: #{_collection_forward.1} parent=1 // pred_region
      _
    $region17: #{_collection_forward.1} parent=1 // pred_fallthru
      _
    // Predicated region
    $region18: #{_collection_forward.1} parent=1 // pred_check
      _
    $region19: #{_collection_forward.1} parent=1 // pred_check_branch
      %30 = sbr.rel (0) target = $region21
    $region20: #{_collection_forward.1} parent=1 // pred_region
      _
    $region21: #{_collection_forward.1} parent=1 // pred_fallthru
      _
    %p31 = scmp.eq.s32.totalorder 0, 0
    %s32 = scalar_select %p31, 0, 0
    %s33 = smul.u32 16, %s32
    %p34 = scmp.lt.s32.totalorder %s33, 15
    %s35 = scalar_select %p34, %s33, 15
    %s36 = smul.addr %s35, 4
    %s37 = scalar_lea.vmem %s1, %s36
    %p38 = scmp.eq.s32.totalorder 0, 0
    %s39 = scalar_select %p38, 0, 0
    %s40 = smul.u32 16, %s39
    %p41 = scmp.lt.s32.totalorder %s40, 15
    %s42 = scalar_select %p41, %s40, 15
    %s43 = smul.addr %s42, 4
    %s44 = scalar_lea.vmem %s1, %s43
    %p45 = scmp.eq.s32.totalorder 0, 0
    %s46 = scalar_select %p45, 0, 0
    %s47 = smul.u32 16, %s46
    %p49 = scmp.eq.s32.totalorder 0, 0
    // Predicated region
    $region22: #{_collection_forward.1} parent=1 // pred_check
      %p50 = pneg %p49
    $region23: #{_collection_forward.1} parent=1 // pred_check_branch
      %52 = sbr.rel (%p50) target = $region25
    $region24: #{_collection_forward.1} parent=1 // pred_region
      %v53 = vld [vmem:[%s44] sm:$0xf]
      %v54 = vld [vmem:[%s44 + $0x4] sm:$0xf]
      %v55 = vld [vmem:[%s44 + $0x8] sm:$0xf]
      %v56 = vld [vmem:[%s44 + $0xc] sm:$0xf]
      %v57 = vld [vmem:[%s44 + $0x10] sm:$0xf]
      %v58 = vld [vmem:[%s44 + $0x14] sm:$0xf]
      %v59 = vld [vmem:[%s44 + $0x18] sm:$0xf]
      %v60 = vld [vmem:[%s44 + $0x1c] sm:$0xf]
      %v61 = vld [vmem:[%s44 + $0x20] sm:$0xf]
      %v62 = vld [vmem:[%s44 + $0x24] sm:$0xf]
      %v63 = vld [vmem:[%s44 + $0x28] sm:$0xf]
      %v64 = vld [vmem:[%s44 + $0x2c] sm:$0xf]
      %v65 = vld [vmem:[%s44 + $0x30] sm:$0xf]
      %v66 = vld [vmem:[%s44 + $0x34] sm:$0xf]
      %v67 = vld [vmem:[%s44 + $0x38] sm:$0xf]
      %v68 = vld [vmem:[%s44 + $0x3c] sm:$0xf]
      %v69 = vld [vmem:[%s2] sm:$0xf]
      %v70 = vld [vmem:[%s2 + $0x4] sm:$0xf]
      %v71 = vld [vmem:[%s2 + $0x8] sm:$0xf]
      %v72 = vld [vmem:[%s2 + $0xc] sm:$0xf]
      %v73 = vld [vmem:[%s2 + $0x10] sm:$0xf]
      %v74 = vld [vmem:[%s2 + $0x14] sm:$0xf]
      %v75 = vld [vmem:[%s2 + $0x18] sm:$0xf]
      %v76 = vld [vmem:[%s2 + $0x1c] sm:$0xf]
      %v77 = vld [vmem:[%s2 + $0x20] sm:$0xf]
      %v78 = vld [vmem:[%s2 + $0x24] sm:$0xf]
      %v79 = vld [vmem:[%s2 + $0x28] sm:$0xf]
      %v80 = vld [vmem:[%s2 + $0x2c] sm:$0xf]
      %v81 = vld [vmem:[%s2 + $0x30] sm:$0xf]
      %v82 = vld [vmem:[%s2 + $0x34] sm:$0xf]
      %v83 = vld [vmem:[%s2 + $0x38] sm:$0xf]
      %v84 = vld [vmem:[%s2 + $0x3c] sm:$0xf]
      %v85 = vld [vmem:[%s3] sm:$0x1]
      %v87 = vlaneseq
      %v88 = vshrl.u32 %v87, 7
      %v89 = vsub.s32 0, %v88
      %v90 = vrot.slane %v85, %v89
      %v108 = vunpack.c.l.b16 %v53
      %v109 = vunpack.c.l.b16 %v54
      %v110 = vunpack.c.l.b16 %v55
      %v111 = vunpack.c.l.b16 %v56
      %v112 = vunpack.c.l.b16 %v57
      %v113 = vunpack.c.l.b16 %v58
      %v114 = vunpack.c.l.b16 %v59
      %v115 = vunpack.c.l.b16 %v60
      %v116 = vunpack.c.l.b16 %v61
      %v117 = vunpack.c.l.b16 %v62
      %v118 = vunpack.c.l.b16 %v63
      %v119 = vunpack.c.l.b16 %v64
      %v120 = vunpack.c.l.b16 %v65
      %v121 = vunpack.c.l.b16 %v66
      %v122 = vunpack.c.l.b16 %v67
      %v123 = vunpack.c.l.b16 %v68
      %v124 = vpack.c.b16 %v109, %v108
      %v125 = vpack.c.b16 %v111, %v110
      %v126 = vpack.c.b16 %v113, %v112
      %v127 = vpack.c.b16 %v115, %v114
      %v128 = vpack.c.b16 %v117, %v116
      %v129 = vpack.c.b16 %v119, %v118
      %v130 = vpack.c.b16 %v121, %v120
      %v131 = vpack.c.b16 %v123, %v122
      %v156 = vunpack.c.l.b16 %v69
      %v157 = vunpack.c.l.b16 %v70
      %v158 = vunpack.c.l.b16 %v71
      %v159 = vunpack.c.l.b16 %v72
      %v160 = vunpack.c.l.b16 %v73
      %v161 = vunpack.c.l.b16 %v74
      %v162 = vunpack.c.l.b16 %v75
      %v163 = vunpack.c.l.b16 %v76
      %v164 = vunpack.c.l.b16 %v77
      %v165 = vunpack.c.l.b16 %v78
      %v166 = vunpack.c.l.b16 %v79
      %v167 = vunpack.c.l.b16 %v80
      %v168 = vunpack.c.l.b16 %v81
      %v169 = vunpack.c.l.b16 %v82
      %v170 = vunpack.c.l.b16 %v83
      %v171 = vunpack.c.l.b16 %v84
      %v172 = vpack.c.b16 %v157, %v156
      %v173 = vpack.c.b16 %v159, %v158
      %v174 = vpack.c.b16 %v161, %v160
      %v175 = vpack.c.b16 %v163, %v162
      %v176 = vpack.c.b16 %v165, %v164
      %v177 = vpack.c.b16 %v167, %v166
      %v178 = vpack.c.b16 %v169, %v168
      %v179 = vpack.c.b16 %v171, %v170
      %188 = vmatprep.subr.bf16.mxu0 0
      %189 = vmatpush1.bf16.msra.mxu0 %v172
      %190 = vmatprep.subr.bf16.mxu0 0
      %191 = vmatpush1.bf16.msra.mxu0 %v173
      %192 = vmatprep.subr.bf16.mxu0 0
      %193 = vmatpush1.bf16.msra.mxu0 %v174
      %194 = vmatprep.subr.bf16.mxu0 0
      %195 = vmatpush1.bf16.msra.mxu0 %v175
      %196 = vmatprep.subr.bf16.mxu0 0
      %197 = vmatpush1.bf16.msra.mxu0 %v176
      %198 = vmatprep.subr.bf16.mxu0 0
      %199 = vmatpush1.bf16.msra.mxu0 %v177
      %200 = vmatprep.subr.bf16.mxu0 0
      %201 = vmatpush1.bf16.msra.mxu0 %v178
      %202 = vmatprep.subr.bf16.mxu0 0
      %203 = vmatpush1.bf16.msra.mxu0 %v179
      %204 = vmatprep.subr.bf16.mxu0 0
      %205 = vmatpush1.bf16.msra.mxu0 0
      %206 = vmatprep.subr.bf16.mxu0 0
      %207 = vmatpush1.bf16.msra.mxu0 0
      %208 = vmatprep.subr.bf16.mxu0 0
      %209 = vmatpush1.bf16.msra.mxu0 0
      %210 = vmatprep.subr.bf16.mxu0 0
      %211 = vmatpush1.bf16.msra.mxu0 0
      %212 = vmatprep.subr.bf16.mxu0 0
      %213 = vmatpush1.bf16.msra.mxu0 0
      %214 = vmatprep.subr.bf16.mxu0 0
      %215 = vmatpush1.bf16.msra.mxu0 0
      %216 = vmatprep.subr.bf16.mxu0 0
      %217 = vmatpush1.bf16.msra.mxu0 0
      %218 = vmatprep.subr.bf16.mxu0 0
      %219 = vmatpush1.bf16.msra.mxu0 0
      %220 = vmatprep.mubr.bf16.mxu0 0
      %221 = vmatmul.mubr.bf16.gmra.mrb[0].mxu0 %v124
      %v222 = vpop.f32.mrb[0].mxu0
      %v223 = vadd.f32 %v90, %v222
      %v224 = vpop.f32.mrb[0].mxu0
      %v225 = vpop.f32.mrb[0].mxu0
      %v226 = vadd.f32 %v90, %v225
      %v227 = vpop.f32.mrb[0].mxu0
      %228 = vmatprep.mubr.bf16.mxu0 0
      %229 = vmatmul.mubr.bf16.gmra.mrb[0].mxu0 %v125
      %v230 = vpop.f32.mrb[0].mxu0
      %v231 = vadd.f32 %v90, %v230
      %v232 = vpop.f32.mrb[0].mxu0
      %v233 = vpop.f32.mrb[0].mxu0
      %v234 = vadd.f32 %v90, %v233
      %v235 = vpop.f32.mrb[0].mxu0
      %236 = vmatprep.mubr.bf16.mxu0 0
      %237 = vmatmul.mubr.bf16.gmra.mrb[0].mxu0 %v126
      %v238 = vpop.f32.mrb[0].mxu0
      %v239 = vadd.f32 %v90, %v238
      %v240 = vpop.f32.mrb[0].mxu0
      %v241 = vpop.f32.mrb[0].mxu0
      %v242 = vadd.f32 %v90, %v241
      %v243 = vpop.f32.mrb[0].mxu0
      %244 = vmatprep.mubr.bf16.mxu0 0
      %245 = vmatmul.mubr.bf16.gmra.mrb[0].mxu0 %v127
      %v246 = vpop.f32.mrb[0].mxu0
      %v247 = vadd.f32 %v90, %v246
      %v248 = vpop.f32.mrb[0].mxu0
      %v249 = vpop.f32.mrb[0].mxu0
      %v250 = vadd.f32 %v90, %v249
      %v251 = vpop.f32.mrb[0].mxu0
      %252 = vmatprep.mubr.bf16.mxu0 0
      %253 = vmatmul.mubr.bf16.gmra.mrb[0].mxu0 %v128
      %v254 = vpop.f32.mrb[0].mxu0
      %v255 = vadd.f32 %v90, %v254
      %v256 = vpop.f32.mrb[0].mxu0
      %v257 = vpop.f32.mrb[0].mxu0
      %v258 = vadd.f32 %v90, %v257
      %v259 = vpop.f32.mrb[0].mxu0
      %260 = vmatprep.mubr.bf16.mxu0 0
      %261 = vmatmul.mubr.bf16.gmra.mrb[0].mxu0 %v129
      %v262 = vpop.f32.mrb[0].mxu0
      %v263 = vadd.f32 %v90, %v262
      %v264 = vpop.f32.mrb[0].mxu0
      %v265 = vpop.f32.mrb[0].mxu0
      %v266 = vadd.f32 %v90, %v265
      %v267 = vpop.f32.mrb[0].mxu0
      %268 = vmatprep.mubr.bf16.mxu0 0
      %269 = vmatmul.mubr.bf16.gmra.mrb[0].mxu0 %v130
      %v270 = vpop.f32.mrb[0].mxu0
      %v271 = vadd.f32 %v90, %v270
      %v272 = vpop.f32.mrb[0].mxu0
      %v273 = vpop.f32.mrb[0].mxu0
      %v274 = vadd.f32 %v90, %v273
      %v275 = vpop.f32.mrb[0].mxu0
      %276 = vmatprep.mubr.bf16.mxu0 0
      %277 = vmatmul.mubr.bf16.gmra.mrb[0].mxu0 %v131
      %v278 = vpop.f32.mrb[0].mxu0
      %v279 = vadd.f32 %v90, %v278
      %v280 = vpop.f32.mrb[0].mxu0
      %v281 = vpop.f32.mrb[0].mxu0
      %v282 = vadd.f32 %v90, %v281
      %v283 = vpop.f32.mrb[0].mxu0
      %284 = vdwg.mxu0
      %v285 = vmax.f32 %v223, 0.0
      %v286 = vmax.f32 %v226, 0.0
      %v287 = vmax.f32 %v231, 0.0
      %v288 = vmax.f32 %v234, 0.0
      %v289 = vmax.f32 %v239, 0.0
      %v290 = vmax.f32 %v242, 0.0
      %v291 = vmax.f32 %v247, 0.0
      %v292 = vmax.f32 %v250, 0.0
      %v293 = vmax.f32 %v255, 0.0
      %v294 = vmax.f32 %v258, 0.0
      %v295 = vmax.f32 %v263, 0.0
      %v296 = vmax.f32 %v266, 0.0
      %v297 = vmax.f32 %v271, 0.0
      %v298 = vmax.f32 %v274, 0.0
      %v299 = vmax.f32 %v279, 0.0
      %v300 = vmax.f32 %v282, 0.0
      %v301 = vpack.c.bf16 %v286, %v285
      %v302 = vpack.c.bf16 %v288, %v287
      %v303 = vpack.c.bf16 %v290, %v289
      %v304 = vpack.c.bf16 %v292, %v291
      %v305 = vpack.c.bf16 %v294, %v293
      %v306 = vpack.c.bf16 %v296, %v295
      %v307 = vpack.c.bf16 %v298, %v297
      %v308 = vpack.c.bf16 %v300, %v299
      %s309 = smul.u32 0, 8
      %s310 = smul.addr %s309, 8
      %s311 = scalar_lea.vmem [#allocation2], %s310
      %312 = vst [vmem:[%s311] sm:$0xff] %v301
      %313 = vst [vmem:[%s311 + $0x8] sm:$0xff] %v302
      %314 = vst [vmem:[%s311 + $0x10] sm:$0xff] %v303
      %315 = vst [vmem:[%s311 + $0x18] sm:$0xff] %v304
      %316 = vst [vmem:[%s311 + $0x20] sm:$0xff] %v305
      %317 = vst [vmem:[%s311 + $0x28] sm:$0xff] %v306
      %318 = vst [vmem:[%s311 + $0x30] sm:$0xff] %v307
      %319 = vst [vmem:[%s311 + $0x38] sm:$0xff] %v308
    $region25: #{_collection_forward.1} parent=1 // pred_fallthru
      _
    %p320 = scmp.eq.s32.totalorder 0, 0
    // Predicated region
    $region26: #{_collection_forward.1} parent=1 // pred_check
      %p321 = pneg %p320
    $region27: #{_collection_forward.1} parent=1 // pred_check_branch
      %323 = sbr.rel (%p321) target = $region29
    $region28: #{_collection_forward.1} parent=1 // pred_region
      %324 = vst [vmem:[#allocation3] sm:$0xff] 0.0
    $region29: #{_collection_forward.1} parent=1 // pred_fallthru
      _
    %v325 = vld [vmem:[#allocation3] sm:$0xff]
    %v326 = vld [vmem:[%s0] sm:$0xf]
    %s327 = smul.u32 0, 8
    %s328 = smul.addr %s327, 8
    %s329 = scalar_lea.vmem [#allocation2], %s328
    %v330 = vld [vmem:[%s329] sm:$0xff]
    %v331 = vld [vmem:[%s329 + $0x8] sm:$0xff]
    %v332 = vld [vmem:[%s329 + $0x10] sm:$0xff]
    %v333 = vld [vmem:[%s329 + $0x18] sm:$0xff]
    %v334 = vld [vmem:[%s329 + $0x20] sm:$0xff]
    %v335 = vld [vmem:[%s329 + $0x28] sm:$0xff]
    %v336 = vld [vmem:[%s329 + $0x30] sm:$0xff]
    %v337 = vld [vmem:[%s329 + $0x38] sm:$0xff]
    %338 = vmatprep.subr.bf16.mxu0 0
    %339 = vmatpush1.bf16.msra.mxu0 %v330
    %340 = vmatprep.subr.bf16.mxu0 0
    %341 = vmatpush1.bf16.msra.mxu0 %v331
    %342 = vmatprep.subr.bf16.mxu0 0
    %343 = vmatpush1.bf16.msra.mxu0 %v332
    %344 = vmatprep.subr.bf16.mxu0 0
    %345 = vmatpush1.bf16.msra.mxu0 %v333
    %346 = vmatprep.subr.bf16.mxu0 0
    %347 = vmatpush1.bf16.msra.mxu0 %v334
    %348 = vmatprep.subr.bf16.mxu0 0
    %349 = vmatpush1.bf16.msra.mxu0 %v335
    %350 = vmatprep.subr.bf16.mxu0 0
    %351 = vmatpush1.bf16.msra.mxu0 %v336
    %352 = vmatprep.subr.bf16.mxu0 0
    %353 = vmatpush1.bf16.msra.mxu0 %v337
    %354 = vmatprep.subr.bf16.mxu0 0
    %355 = vmatpush1.bf16.msra.mxu0 0
    %356 = vmatprep.subr.bf16.mxu0 0
    %357 = vmatpush1.bf16.msra.mxu0 0
    %358 = vmatprep.subr.bf16.mxu0 0
    %359 = vmatpush1.bf16.msra.mxu0 0
    %360 = vmatprep.subr.bf16.mxu0 0
    %361 = vmatpush1.bf16.msra.mxu0 0
    %362 = vmatprep.subr.bf16.mxu0 0
    %363 = vmatpush1.bf16.msra.mxu0 0
    %364 = vmatprep.subr.bf16.mxu0 0
    %365 = vmatpush1.bf16.msra.mxu0 0
    %366 = vmatprep.subr.bf16.mxu0 0
    %367 = vmatpush1.bf16.msra.mxu0 0
    %368 = vmatprep.subr.bf16.mxu0 0
    %369 = vmatpush1.bf16.msra.mxu0 0
    %370 = vmatprep.mubr.bf16.mxu0 0
    %371 = vmatmul.mubr.bf16.gmra.mrb[0].mxu0 %v326
    %v372 = vpop.f32.mrb[0].mxu0
    %v373 = vadd.f32 0.0, %v372
    %v374 = vpop.f32.mrb[0].mxu0
    %v375 = vpop.f32.mrb[0].mxu0
    %v376 = vpop.f32.mrb[0].mxu0
    %377 = vdwg.mxu0
    %v378 = vadd.f32 %v325, %v373
    %379 = vst [vmem:[#allocation3] sm:$0xff] %v378
    // Predicated region
    $region30: #{_collection_forward.1} parent=1 // pred_check
      %p380 = pneg %p320
    $region31: #{_collection_forward.1} parent=1 // pred_check_branch
      %382 = sbr.rel (%p380) target = $region33
    $region32: #{_collection_forward.1} parent=1 // pred_region
      %v383 = vld [vmem:[#allocation3] sm:$0xff]
      %v384 = vld [vmem:[%s4] sm:$0xff]
      %386 = vset.pattern.permute.xlu0 0
      %387 = vperm.xlu0 %386, %v384
      %v388 = vpop.permute.xlu0 %387
      %v390 = vmul.f32 %v383, %v388
      %391 = vst [vmem:[#allocation3] sm:$0xff] %v390
    $region33: #{_collection_forward.1} parent=1 // pred_fallthru
      _
    // Predicated region
    $region34: #{_collection_forward.1} parent=1 // pred_check
      _
    $region35: #{_collection_forward.1} parent=1 // pred_check_branch
      %393 = sbr.rel (0) target = $region37
    $region36: #{_collection_forward.1} parent=1 // pred_region
      %s395 = ssub.s32 128, 128
      %396 = vsyncadd [#allocation4], %s395
      %s398 = sshll.u32 [#allocation3], 4
      %s399 = int_to_ptr.vmem [resolvable:$true] %s398
      %401 = dma.vmem_to_hbm [thread:$0]  %s399, 128, %s5, [#allocation4]
    $region37: #{_collection_forward.1} parent=1 // pred_fallthru
      _
    // Predicated region
    $region38: #{_collection_forward.1} parent=1 // pred_check
      _
    $region39: #{_collection_forward.1} parent=1 // pred_check_branch
      %403 = sbr.rel (0) target = $region41
    $region40: #{_collection_forward.1} parent=1 // pred_region
      %404 = dma.done [#allocation4], 128
    $region41: #{_collection_forward.1} parent=1 // pred_fallthru
      _
    %405 = vsyncpa [#allocation4], 1

</llo_original>
